<compile_context>
chip_gen: v7x
topology: tpu7x:2x2x1
jax: 0.10.0
libtpu: 0.0.40
codegen_flags: <defaults>
</compile_context>

<pallas_src>
import functools

import jax
import jax.numpy as jnp
from jax.experimental import pallas as pl
from jax.experimental.pallas import tpu as pltpu

_LANES = 128
_SUBLANES = 8
_PAD_LOGIT = 60.0   # bce(60, 1) = log1p(exp(-60)) ~ 8.8e-27 -> focal == 0 in f32 (gamma >= 1)
_PAD_TARGET = 1.0


def _focal_loss_kernel(x_ref, t_ref, out_ref, *, gamma, rows_valid,
                       block_rows, chunk_rows, steps_per_part):
    i = pl.program_id(0)   # partition (second TensorCore on v7x)
    j = pl.program_id(1)   # streaming / reduction step within the partition

    @pl.when(j == 0)
    def _():
        out_ref[...] = jnp.zeros_like(out_ref)

    # Unclamped logical block index. The index_map clamps the DMA so it never
    # reads a fully out-of-range window; rows outside [0, rows_valid) are
    # zeroed by the select below, so duplicate (clamped) blocks contribute 0.
    base_row = (i * steps_per_part + j) * block_rows

    num_chunks = block_rows // chunk_rows
    lane_fold = (chunk_rows % _SUBLANES) == 0

    def chunk_body(c, carry):
        r0 = pl.multiple_of(c * chunk_rows, chunk_rows)
        # Keep all math in f32 on-chip (v5e has no bf16 VPU/EUP path).
        x = x_ref[pl.ds(r0, chunk_rows), :].astype(jnp.float32)
        t = t_ref[pl.ds(r0, chunk_rows), :].astype(jnp.float32)

        # Numerically-stable BCE-with-logits (matches PyTorch):
        #   bce = max(x, 0) - x*t + log1p(exp(-|x|))
        bce = jnp.maximum(x, 0.0) - x * t + jnp.log1p(jnp.exp(-jnp.abs(x)))
        # TODO(synk): for hard 0/1 targets, p_t can reuse exp(-|x|) via a
        # sigmoid identity (2 EUP ops/elem instead of 3); matters on v7x only.
        p_t = jnp.exp(-bce)
        u = 1.0 - p_t  # always >= 0

        g = float(gamma)
        if g.is_integer() and 0 <= g <= 8:
            gi = int(g)  # small integer gamma: VPU multiplies, no EUP pow
            if gi == 0:
                w = jnp.ones_like(u)
            else:
                w = u
                for _ in range(gi - 1):
                    w = w * u
        else:
            w = u ** g   # general gamma: exp(g*log(u)) lowering

        focal = w * bce

        # Mask rows past the logical end of the data (ragged last block and
        # clamped duplicate blocks). Select, not multiply, so stale / NaN
        # garbage in the out-of-bounds part of the VMEM tile cannot leak in.
        rows = base_row + r0 + jax.lax.broadcasted_iota(
            jnp.int32, (chunk_rows, _LANES), 0)
        focal = jnp.where(rows < rows_valid, focal, 0.0)

        if lane_fold:
            # Lane-parallel partial sum onto the resident (8,128) accumulator.
            out_ref[...] += jnp.sum(focal.reshape(-1, _SUBLANES, _LANES), axis=0)
        else:
            # Tiny, non-8-aligned single-block inputs only.
            out_ref[0:1, :] += jnp.sum(focal, axis=0, keepdims=True)
        return carry

    @pl.when(base_row < rows_valid)   # skip compute for fully-masked blocks
    def _():
        jax.lax.fori_loop(0, num_chunks, chunk_body, 0, unroll=True)


def _default_num_parts():
    # 2 partitions only where there are 2 TensorCores per chip (v7x).
    try:
        kind = jax.devices()[0].device_kind.lower()
    except Exception:
        return 1
    return 2 if "v7" in kind else 1


def focal_loss(logits, targets, gamma=2.0, *, block_rows=4096, chunk_rows=512,
               num_parts=None):
    """Pallas TPU implementation of FocalLoss.forward. Returns a scalar f32."""
    assert logits.shape == targets.shape
    n = logits.size
    assert n > 0

    x = logits.reshape(-1)   # row-major collapse: free (bitcast), no HBM pass
    t = targets.reshape(-1)

    # --- shape handling: avoid any HBM copy when n is lane-aligned ----------
    if n % _LANES == 0:
        rows_total = n // _LANES
    else:
        # TODO(synk): lane-unaligned n still needs one pad pass; a fully
        # copy-free path would need 1-D blocks + in-kernel tail masking.
        padded = -(-n // (_SUBLANES * _LANES)) * (_SUBLANES * _LANES)
        pad = padded - n
        # Padding (logit=+60, target=1) contributes exactly 0 for gamma >= 1
        # (and ~1e-26/elem for gamma == 0), so no extra mask stream is needed.
        x = jnp.pad(x, (0, pad), constant_values=_PAD_LOGIT)
        t = jnp.pad(t, (0, pad), constant_values=_PAD_TARGET)
        rows_total = padded // _LANES
    x = x.reshape(rows_total, _LANES)
    t = t.reshape(rows_total, _LANES)

    # --- tiling --------------------------------------------------------------
    block_rows = max(_SUBLANES, (int(block_rows) // _SUBLANES) * _SUBLANES)
    if rows_total <= block_rows:
        block_rows = rows_total               # single full-array block
    steps_total = pl.cdiv(rows_total, block_rows)

    if num_parts is None:
        num_parts = _default_num_parts()
    num_parts = max(1, min(int(num_parts), steps_total))
    steps_per_part = pl.cdiv(steps_total, num_parts)

    chunk_rows = min(int(chunk_rows), block_rows)
    if chunk_rows <= 0 or block_rows % chunk_rows != 0:
        chunk_rows = block_rows

    # Clamp the DMA window for the (at most one) rounding block past the end;
    # its contribution is zeroed in-kernel via the row mask.
    last_block = steps_total - 1
    in_spec = pl.BlockSpec(
        (block_rows, _LANES),
        lambda i, j, spp=steps_per_part, last=last_block:
            (jnp.minimum(i * spp + j, last), 0),
    )
    out_spec = pl.BlockSpec((_SUBLANES, _LANES), lambda i, j: (i, 0))

    kernel = functools.partial(
        _focal_loss_kernel,
        gamma=float(gamma),
        rows_valid=rows_total,
        block_rows=block_rows,
        chunk_rows=chunk_rows,
        steps_per_part=steps_per_part,
    )

    partials = pl.pallas_call(
        kernel,
        out_shape=jax.ShapeDtypeStruct(
            (num_parts * _SUBLANES, _LANES), jnp.float32),
        grid_spec=pltpu.PrefetchScalarGridSpec(
            num_scalar_prefetch=0,
            grid=(num_parts, steps_per_part),
            in_specs=[in_spec, in_spec],
            out_specs=out_spec,
        ),
        compiler_params=pltpu.CompilerParams(
            # TODO(synk): on v7x, verify the parts axis splits across both
            # TensorCores; if not, switch it to pltpu.CORE_PARALLEL.
            dimension_semantics=("parallel", "arbitrary"),
            # Raised above the conservative scoped defaults (16 MiB on v5e,
            # 32 MiB on v6e/v7x) so 4K-row double-buffered tiles fit; well
            # under v7x's 64 MiB physical VMEM.
            vmem_limit_bytes=48 * 1024 * 1024,
        ),
    )(x, t)

    return jnp.sum(partials) * (1.0 / float(n))


def _focal_loss_ref(logits, targets, gamma=2.0):
    x = logits.astype(jnp.float32)
    t = targets.astype(jnp.float32)
    bce = jnp.maximum(x, 0.0) - x * t + jnp.log1p(jnp.exp(-jnp.abs(x)))
    p_t = jnp.exp(-bce)
    return jnp.mean(((1.0 - p_t) ** gamma) * bce)


if __name__ == "__main__":
    key = jax.random.PRNGKey(0)
    k1, k2, k3, k4, k5, k6 = jax.random.split(key, 6)

    # 1) MetaMLP-style binary classification head: (batch, 1) logits/targets.
    batch = 64
    logits = jax.random.normal(k1, (batch, 1), dtype=jnp.float32) * 2.0
    targets = jax.random.bernoulli(k2, 0.5, (batch, 1)).astype(jnp.float32)
    loss = jax.block_until_ready(focal_loss(logits, targets, gamma=2.0))
    ref = _focal_loss_ref(logits, targets, gamma=2.0)
    assert jnp.allclose(loss, ref, rtol=1e-5, atol=1e-6), (loss, ref)

    # 2) Lane-unaligned ragged case (exercises the pad fallback path).
    logits2 = jax.random.normal(k3, (257, 33), dtype=jnp.float32) * 3.0
    targets2 = jax.random.bernoulli(k4, 0.3, (257, 33)).astype(jnp.float32)
    loss2 = jax.block_until_ready(focal_loss(logits2, targets2, gamma=2.0))
    ref2 = _focal_loss_ref(logits2, targets2, gamma=2.0)
    assert jnp.allclose(loss2, ref2, rtol=1e-5, atol=1e-6), (loss2, ref2)

    # 3) Lane-aligned bf16 case: copy-free path, multi-step grid, ragged last
    #    block, two partitions (the clamped rounding block is masked to 0).
    logits3 = (jax.random.normal(k5, (520, 128), dtype=jnp.float32)
               * 2.5).astype(jnp.bfloat16)
    targets3 = jax.random.bernoulli(k6, 0.4, (520, 128)).astype(jnp.bfloat16)
    loss3 = jax.block_until_ready(
        focal_loss(logits3, targets3, gamma=2.0, block_rows=128, num_parts=2))
    ref3 = _focal_loss_ref(logits3, targets3, gamma=2.0)
    assert jnp.allclose(loss3, ref3, rtol=1e-5, atol=1e-6), (loss3, ref3)

    print("KERNEL_OK")
</pallas_src>

<mosaic_0001>
module attributes {stable_mosaic.version = 11 : i64} {
  func.func @_focal_loss_kernel(%arg0: i32, %arg1: i32, %arg2: memref<8x128xf32, #tpu.memory_space<vmem>>, %arg3: memref<8x128xf32, #tpu.memory_space<vmem>>, %arg4: memref<8x128xf32, #tpu.memory_space<vmem>>) attributes {dimension_semantics = [#tpu.dimension_semantics<parallel>, #tpu.dimension_semantics<arbitrary>], iteration_bounds = array<i64: 1, 1>, scalar_prefetch = 0 : i64, scratch_operands = 0 : i64, tpu.core_type = #tpu.core_type<tc>, window_params = [{transform_indices = @transform_0, window_bounds = array<i64: 8, 128>}, {transform_indices = @transform_1, window_bounds = array<i64: 8, 128>}, {transform_indices = @transform_2, window_bounds = array<i64: 8, 128>}]} {
    %c0_i32 = arith.constant 0 : i32
    %0 = arith.cmpi eq, %arg1, %c0_i32 : i32
    %1 = arith.extui %0 : i1 to i32
    %c0_i32_0 = arith.constant 0 : i32
    %2 = arith.cmpi ne, %1, %c0_i32_0 : i32
    scf.if %2 {
      %cst = arith.constant 0.000000e+00 : f32
      %9 = vector.broadcast %cst : f32 to vector<8x128xf32>
      %c0 = arith.constant 0 : index
      %c0_3 = arith.constant 0 : index
      %10 = vector.load %arg4[%c0, %c0_3] : memref<8x128xf32, #tpu.memory_space<vmem>>, vector<8x128xf32>
      tpu.vector_store %arg4[%c0, %c0_3], %9 {strides = array<i32>} : memref<8x128xf32, #tpu.memory_space<vmem>>, vector<8x128xf32>,
    } else {
    }
    %c1_i32 = arith.constant 1 : i32
    %3 = arith.muli %arg0, %c1_i32 : i32
    %4 = arith.addi %3, %arg1 : i32
    %c8_i32 = arith.constant 8 : i32
    %5 = arith.muli %4, %c8_i32 : i32
    %c8_i32_1 = arith.constant 8 : i32
    %6 = arith.cmpi slt, %5, %c8_i32_1 : i32
    %7 = arith.extui %6 : i1 to i32
    %c0_i32_2 = arith.constant 0 : i32
    %8 = arith.cmpi ne, %7, %c0_i32_2 : i32
    scf.if %8 {
      %c0_i32_3 = arith.constant 0 : i32
      %c8_i32_4 = arith.constant 8 : i32
      %9 = arith.muli %c0_i32_3, %c8_i32_4 : i32
      %10 = tpu.assume_multiple %9, 8 : i32
      %11 = arith.index_cast %10 : i32 to index
      %c0 = arith.constant 0 : index
      %12 = vector.load %arg2[%11, %c0] : memref<8x128xf32, #tpu.memory_space<vmem>>, vector<8x128xf32>
      %13 = arith.index_cast %10 : i32 to index
      %c0_5 = arith.constant 0 : index
      %14 = vector.load %arg3[%13, %c0_5] : memref<8x128xf32, #tpu.memory_space<vmem>>, vector<8x128xf32>
      %cst = arith.constant 0.000000e+00 : f32
      %15 = vector.broadcast %cst : f32 to vector<8x128xf32>
      %16 = arith.maximumf %12, %15 : vector<8x128xf32>
      %17 = arith.mulf %12, %14 : vector<8x128xf32>
      %18 = arith.subf %16, %17 : vector<8x128xf32>
      %19 = math.absf %12 : vector<8x128xf32>
      %cst_6 = arith.constant 0.000000e+00 : f32
      %20 = vector.broadcast %cst_6 : f32 to vector<8x128xf32>
      %21 = arith.subf %20, %19 : vector<8x128xf32>
      %22 = math.exp %21 : vector<8x128xf32>
      %23 = math.log1p %22 : vector<8x128xf32>
      %24 = arith.addf %18, %23 : vector<8x128xf32>
      %cst_7 = arith.constant 0.000000e+00 : f32
      %25 = vector.broadcast %cst_7 : f32 to vector<8x128xf32>
      %26 = arith.subf %25, %24 : vector<8x128xf32>
      %27 = math.exp %26 : vector<8x128xf32>
      %cst_8 = arith.constant 1.000000e+00 : f32
      %28 = vector.broadcast %cst_8 : f32 to vector<8x128xf32>
      %29 = arith.subf %28, %27 : vector<8x128xf32>
      %30 = arith.mulf %29, %29 : vector<8x128xf32>
      %31 = arith.mulf %30, %24 : vector<8x128xf32>
      %32 = arith.addi %5, %10 : i32
      %33 = tpu.iota {dimensions = array<i32: 0>} : vector<8x128xi32>
      %34 = vector.broadcast %32 : i32 to vector<8x128xi32>
      %35 = arith.addi %34, %33 : vector<8x128xi32>
      %c8_i32_9 = arith.constant 8 : i32
      %36 = vector.broadcast %c8_i32_9 : i32 to vector<8x128xi32>
      %37 = arith.cmpi slt, %35, %36 : vector<8x128xi32>
      %cst_10 = arith.constant 0.000000e+00 : f32
      %38 = vector.broadcast %cst_10 : f32 to vector<8x128xf32>
      %39 = arith.select %37, %31, %38 : vector<8x128xi1>, vector<8x128xf32>
      %c0_11 = arith.constant 0 : index
      %c0_12 = arith.constant 0 : index
      %40 = vector.load %arg4[%c0_11, %c0_12] : memref<8x128xf32, #tpu.memory_space<vmem>>, vector<8x128xf32>
      %41 = vector.shape_cast %39 : vector<8x128xf32> to vector<1x8x128xf32>
      %cst_13 = arith.constant dense<0.000000e+00> : vector<8x128xf32>
      %42 = vector.multi_reduction <add>, %41, %cst_13 [0] : vector<1x8x128xf32> to vector<8x128xf32>
      %43 = arith.addf %40, %42 : vector<8x128xf32>
      %c0_14 = arith.constant 0 : index
      %c0_15 = arith.constant 0 : index
      %44 = vector.load %arg4[%c0_14, %c0_15] : memref<8x128xf32, #tpu.memory_space<vmem>>, vector<8x128xf32>
      tpu.vector_store %arg4[%c0_14, %c0_15], %43 {strides = array<i32>} : memref<8x128xf32, #tpu.memory_space<vmem>>, vector<8x128xf32>,
      %c1_i32_16 = arith.constant 1 : i32
    } else {
    }
    return
  }
  func.func @transform_0(%arg0: i32, %arg1: i32) -> (i32, i32) {
    %c1_i32 = arith.constant 1 : i32
    %0 = arith.muli %arg0, %c1_i32 : i32
    %1 = arith.addi %0, %arg1 : i32
    %c0_i32 = arith.constant 0 : i32
    %2 = arith.minsi %1, %c0_i32 : i32
    %c0_i32_0 = arith.constant 0 : i32
    %c0_i32_1 = arith.constant 0 : i32
    return %2, %c0_i32_0 : i32, i32
  }
  func.func @transform_1(%arg0: i32, %arg1: i32) -> (i32, i32) {
    %c1_i32 = arith.constant 1 : i32
    %0 = arith.muli %arg0, %c1_i32 : i32
    %1 = arith.addi %0, %arg1 : i32
    %c0_i32 = arith.constant 0 : i32
    %2 = arith.minsi %1, %c0_i32 : i32
    %c0_i32_0 = arith.constant 0 : i32
    %c0_i32_1 = arith.constant 0 : i32
    return %2, %c0_i32_0 : i32, i32
  }
  func.func @transform_2(%arg0: i32, %arg1: i32) -> (i32, i32) {
    %c0_i32 = arith.constant 0 : i32
    %c0_i32_0 = arith.constant 0 : i32
    return %arg0, %c0_i32 : i32, i32
  }
}

</mosaic_0001>

<llo_original>
// kernel: tpu_custom_call.1
$region0: #{tpu_custom_call.1}
  #allocation0 [shape = 'u32[]', space=smem, size = 0x4, offset = 0x4, fixed_abs, tag = 'smem constant byte address 0x4 - core index']
  #allocation1 [shape = 'u32[144,128]{1,0:T(1,128)}', space=vmem, size = 0x12000, scoped, tag = 'internal scratch']
  %s0 = inlined_call_operand.hbm [shape: f32[8,128], index: 0, kind: input, shape index: {}]
  %s1 = inlined_call_operand.hbm [shape: f32[8,128], index: 1, kind: input, shape index: {}]
  %s2 = inlined_call_operand.hbm [shape: f32[8,128], index: 2, kind: output, shape index: {}]
  %s3 = sld [smem:[#allocation0]]
  $region34: #{tpu_custom_call.1} parent=0
    _
  %s5 = ssub.s32 1, %s3
  %s6 = scalar_select 0, %s5, %s3
  $region1: #{tpu_custom_call.1} parent=0
    #allocation2 [shape = 'u8[4096]{0}', space=vmem, size = 0x1000, scoped, tag = 'input window, operand 0, single buffered']
    #allocation3 [shape = 's32[1]{0}', space=sflag, size = 0x4, scoped, tag = 'scoped memory for tpu_custom_call.1']
    #allocation4 [shape = 's32[1]{0}', space=sflag, size = 0x4, scoped, tag = 'scoped memory for tpu_custom_call.1']
    #allocation5 [shape = 'u8[4096]{0}', space=vmem, size = 0x1000, scoped, tag = 'input window, operand 1, single buffered']
    #allocation6 [shape = 's32[1]{0}', space=sflag, size = 0x4, scoped, tag = 'scoped memory for tpu_custom_call.1']
    #allocation7 [shape = 'u8[4096]{0}', space=vmem, size = 0x1000, scoped, tag = 'output window, operand 0, single buffered']
    %7 = vsyncpa [#allocation3], 0
    %8 = vsyncpa [#allocation6], 0
    %9 = vsyncpa [#allocation4], 0
    // Predicated region
    $region2: #{tpu_custom_call.1} parent=1 // pred_check
      _
    $region3: #{tpu_custom_call.1} parent=1 // pred_check_branch
      %11 = sbr.rel (0) target = $region5
    $region4: #{tpu_custom_call.1} parent=1 // pred_region
      %s12 = sadd.s32 0, 0
      %p13 = scmp.lt.s32.totalorder %s12, 0
      %s14 = scalar_select %p13, %s12, 0
      %s16 = ssub.s32 128, 128
      %17 = vsyncadd [#allocation3], %s16
      %s18 = smul.addr %s14, 128
      %s19 = scalar_lea.hbm %s0, %s18
      %s21 = sshll.u32 [#allocation2], 4
      %s22 = int_to_ptr.vmem [resolvable:$true] %s21
      %24 = dma.hbm_to_vmem [thread:$0]  %s19, 128, %s22, [#allocation3]
    $region5: #{tpu_custom_call.1} parent=1 // pred_fallthru
      _
    // Predicated region
    $region6: #{tpu_custom_call.1} parent=1 // pred_check
      _
    $region7: #{tpu_custom_call.1} parent=1 // pred_check_branch
      %26 = sbr.rel (0) target = $region9
    $region8: #{tpu_custom_call.1} parent=1 // pred_region
      %s27 = sadd.s32 0, 0
      %p28 = scmp.lt.s32.totalorder %s27, 0
      %s29 = scalar_select %p28, %s27, 0
      %s31 = ssub.s32 128, 128
      %32 = vsyncadd [#allocation6], %s31
      %s33 = smul.addr %s29, 128
      %s34 = scalar_lea.hbm %s1, %s33
      %s36 = sshll.u32 [#allocation5], 4
      %s37 = int_to_ptr.vmem [resolvable:$true] %s36
      %39 = dma.hbm_to_vmem [thread:$0]  %s34, 128, %s37, [#allocation6]
    $region9: #{tpu_custom_call.1} parent=1 // pred_fallthru
      _
    // Predicated region
    $region10: #{tpu_custom_call.1} parent=1 // pred_check
      _
    $region11: #{tpu_custom_call.1} parent=1 // pred_check_branch
      %41 = sbr.rel (0) target = $region13
    $region12: #{tpu_custom_call.1} parent=1 // pred_region
      %42 = dma.done [#allocation3], 128
    $region13: #{tpu_custom_call.1} parent=1 // pred_fallthru
      _
    // Predicated region
    $region14: #{tpu_custom_call.1} parent=1 // pred_check
      _
    $region15: #{tpu_custom_call.1} parent=1 // pred_check_branch
      %44 = sbr.rel (0) target = $region17
    $region16: #{tpu_custom_call.1} parent=1 // pred_region
      %45 = dma.done [#allocation6], 128
    $region17: #{tpu_custom_call.1} parent=1 // pred_fallthru
      _
    %s46 = sadd.s32 0, 0
    %p47 = scmp.lt.s32.totalorder %s46, 0
    %s48 = scalar_select %p47, %s46, 0
    %s49 = sadd.s32 0, 0
    %p50 = scmp.lt.s32.totalorder %s49, 0
    %s51 = scalar_select %p50, %s49, 0
    %p52 = scmp.eq.s32.totalorder 0, 0
    // Predicated region
    $region18: #{tpu_custom_call.1} parent=1 // pred_check
      %p53 = pneg %p52
    $region19: #{tpu_custom_call.1} parent=1 // pred_check_branch
      %55 = sbr.rel (%p53) target = $region21
    $region20: #{tpu_custom_call.1} parent=1 // pred_region
      %56 = vst [vmem:[#allocation7] sm:$0xff] 0.0
    $region21: #{tpu_custom_call.1} parent=1 // pred_fallthru
      _
    %s57 = sadd.s32 0, 0
    %s58 = smul.u32 %s57, 8
    %p59 = scmp.lt.s32.totalorder %s58, 8
    // Predicated region
    $region22: #{tpu_custom_call.1} parent=1 // pred_check
      %p60 = pneg %p59
    $region23: #{tpu_custom_call.1} parent=1 // pred_check_branch
      %62 = sbr.rel (%p60) target = $region25
    $region24: #{tpu_custom_call.1} parent=1 // pred_region
      %v63 = vld [vmem:[#allocation2] sm:$0xff]
      %v64 = vld [vmem:[#allocation5] sm:$0xff]
      %v65 = vmax.f32 %v63, 0.0
      %v66 = vmul.f32 %v63, %v64
      %v67 = vsub.f32 %v65, %v66
      %v68 = vand.u32 2147483647, %v63
      %v69 = vsub.f32 0.0, %v68
      %v70 = vmul.f32 %v69, 1.442695
      %v71 = vpow.pop %v70
      %v72 = vadd.f32 %v71, 1.0
      %v73 = vlog2.pop %v72
      %v74 = vmul.f32 %v73, 0.6931472
      %v75 = vmul.f32 -0.5, %v71
      %v76 = vadd.f32 %v75, 1.0
      %v77 = vmul.f32 %v76, %v71
      %v78 = vand.u32 2147483647, %v71
      %vm79 = vcmp.lt.f32.partialorder %v78, 0.0004427343
      %v80 = vsel %vm79, %v77, %v74
      %v81 = vadd.f32 %v67, %v80
      %v82 = vsub.f32 0.0, %v81
      %v83 = vmul.f32 %v82, 1.442695
      %v84 = vpow.pop %v83
      %v85 = vsub.f32 1.0, %v84
      %v86 = vmul.f32 %v85, %v85
      %v87 = vmul.f32 %v86, %v81
      %s88 = sadd.s32 %s58, 0
      %v89 = vlaneseq
      %v90 = vshrl.u32 %v89, 7
      %v91 = vstv %s88
      %v92 = vadd.s32 %v91, %v90
      %vm93 = vcmp.lt.s32.totalorder %v92, 8
      %v94 = vsel %vm93, %v87, 0.0
      %v95 = vld [vmem:[#allocation7] sm:$0xff]
      %v96 = vadd.f32 %v94, 0.0
      %v97 = vadd.f32 %v95, %v96
      %98 = vst [vmem:[#allocation7] sm:$0xff] %v97
    $region25: #{tpu_custom_call.1} parent=1 // pred_fallthru
      _
    // Predicated region
    $region26: #{tpu_custom_call.1} parent=1 // pred_check
      _
    $region27: #{tpu_custom_call.1} parent=1 // pred_check_branch
      %100 = sbr.rel (0) target = $region29
    $region28: #{tpu_custom_call.1} parent=1 // pred_region
      %s102 = ssub.s32 128, 128
      %103 = vsyncadd [#allocation4], %s102
      %s105 = sshll.u32 [#allocation7], 4
      %s106 = int_to_ptr.vmem [resolvable:$true] %s105
      %108 = dma.vmem_to_hbm [thread:$0]  %s106, 128, %s2, [#allocation4]
    $region29: #{tpu_custom_call.1} parent=1 // pred_fallthru
      _
    // Predicated region
    $region30: #{tpu_custom_call.1} parent=1 // pred_check
      _
    $region31: #{tpu_custom_call.1} parent=1 // pred_check_branch
      %110 = sbr.rel (0) target = $region33
    $region32: #{tpu_custom_call.1} parent=1 // pred_region
      %111 = dma.done [#allocation4], 128
    $region33: #{tpu_custom_call.1} parent=1 // pred_fallthru
      _
    %112 = vsyncpa [#allocation3], 1
    %113 = vsyncpa [#allocation6], 1
    %114 = vsyncpa [#allocation4], 1

</llo_original>
